<compile_context>
chip_gen: v7x
topology: tpu7x:2x2x1
jax: 0.10.0
libtpu: 0.0.40
codegen_flags: <defaults>
</compile_context>

<pallas_src>
import functools

import jax
import jax.numpy as jnp
from jax.experimental import pallas as pl
from jax.experimental.pallas import tpu as pltpu

ALPHA = 0.2   # opt['leaky']
RATE = 0.7    # opt['rate']  (source_rate)

_VMEM = pl.BlockSpec(memory_space=pltpu.MemorySpace.VMEM)
_VMEM_LIMIT = 48 * 1024 * 1024          # fits every generation (v7x physical = 64 MiB)


def _nbytes(*arrays):
    return int(sum(int(a.size) * a.dtype.itemsize for a in arrays))


def _leaky(y, alpha):
    return jnp.where(y > 0.0, y, alpha * y)


def _gcn_block(x_f32, adj_bf16, w_bf16, b_f32, alpha):
    """GCN(x, adj) = LeakyReLU(adj @ (x @ W) + b); bf16 MXU inputs, f32 accumulate."""
    h = jnp.dot(x_f32.astype(jnp.bfloat16), w_bf16,
                preferred_element_type=jnp.float32)
    y = jnp.dot(adj_bf16, h.astype(jnp.bfloat16),
                preferred_element_type=jnp.float32) + b_f32
    return _leaky(y, alpha)


# --------------------------------------------------------------------------
# Kernel 1: fully fused DGCNLayer_cross forward
# --------------------------------------------------------------------------
def _dgcn_layer_kernel(s_fea_ref, t_fea_ref,
                       s_uv_ref, s_vu_ref, t_uv_ref, t_vu_ref,
                       w1_ref, b1_ref, w2_ref, b2_ref,
                       w3_ref, b3_ref, w4_ref, b4_ref,
                       wu_ref, bu_ref,
                       o_ref, cat_ref, *, alpha, rate, f_dim):
    s_fea = s_fea_ref[...]
    t_fea = t_fea_ref[...]

    # Source branch: item-side GCN then user-side GCN.
    s_h1 = _gcn_block(s_fea, s_vu_ref[...], w1_ref[...], b1_ref[...], alpha)   # (n_i, H)
    s_h2 = _gcn_block(s_h1, s_uv_ref[...], w3_ref[...], b3_ref[...], alpha)    # (n_u, F)
    # Target branch.
    t_h1 = _gcn_block(t_fea, t_vu_ref[...], w2_ref[...], b2_ref[...], alpha)
    t_h2 = _gcn_block(t_h1, t_uv_ref[...], w4_ref[...], b4_ref[...], alpha)

    # [s_h2 | s_fea | t_h2 | t_fea]  ->  (n_u, 4F) VMEM scratch.  One wide
    # K=4F matmul against the block-diagonal fused union weight gives both
    # domain unions as a single 2F-wide (lane-dense) output.
    cat_ref[:, 0 * f_dim:1 * f_dim] = s_h2
    cat_ref[:, 1 * f_dim:2 * f_dim] = s_fea
    cat_ref[:, 2 * f_dim:3 * f_dim] = t_h2
    cat_ref[:, 3 * f_dim:4 * f_dim] = t_fea

    st = jnp.dot(cat_ref[...].astype(jnp.bfloat16), wu_ref[...],
                 preferred_element_type=jnp.float32) + bu_ref[...]             # (n_u, 2F)
    s_u = jnp.maximum(st[:, :f_dim], 0.0)
    t_u = jnp.maximum(st[:, f_dim:], 0.0)
    o_ref[...] = rate * s_u + (1.0 - rate) * t_u


def dgcn_layer_cross(fp, s_fea, t_fea, s_UV, s_VU, t_UV, t_VU,
                     *, alpha=ALPHA, rate=RATE):
    n_u, f_dim = s_fea.shape
    n_i = s_VU.shape[0]
    h_dim = fp['w1'].shape[1]

    flops = int(2 * 2 * (n_u * f_dim * h_dim + n_i * n_u * h_dim
                         + n_i * h_dim * f_dim + n_u * n_i * f_dim)
                + 2 * n_u * (4 * f_dim) * (2 * f_dim))
    args = (s_fea, t_fea, s_UV, s_VU, t_UV, t_VU,
            fp['w1'], fp['b1'], fp['w2'], fp['b2'],
            fp['w3'], fp['b3'], fp['w4'], fp['b4'],
            fp['wu'], fp['bu'])
    cost = pl.CostEstimate(flops=flops, transcendentals=0,
                           bytes_accessed=_nbytes(*args) + n_u * f_dim * 4)

    out = pl.pallas_call(
        functools.partial(_dgcn_layer_kernel, alpha=alpha, rate=rate, f_dim=f_dim),
        out_shape=jax.ShapeDtypeStruct((n_u, f_dim), jnp.float32),
        in_specs=[_VMEM] * 16,
        out_specs=_VMEM,
        scratch_shapes=[pltpu.VMEM((n_u, 4 * f_dim), jnp.float32)],
        compiler_params=pltpu.CompilerParams(vmem_limit_bytes=_VMEM_LIMIT),
        cost_estimate=cost,
    )(*args)
    # PyTorch module returns the same mixed tensor for both domains.
    return out, out


# --------------------------------------------------------------------------
# Kernel 2: fully fused LastLayer_cross forward
# --------------------------------------------------------------------------
def _last_layer_kernel(s_fea_ref, t_fea_ref,
                       s_uv_ref, s_vu_ref, t_uv_ref, t_vu_ref,
                       w1_ref, b1_ref, w2_ref, b2_ref,
                       w3ms_ref, b3ms_ref, w4ms_ref, b4ms_ref,
                       wmix_ref, bmix_ref,
                       o_ref, cat_ref, *, alpha, rate, f_dim):
    s_fea = s_fea_ref[...]
    t_fea = t_fea_ref[...]

    s_h1 = _gcn_block(s_fea, s_vu_ref[...], w1_ref[...], b1_ref[...], alpha)     # (n_i, H)
    # mean/logstd GCNs share the adj @ h matmul via W3m|W3s concatenation.
    s_ms = _gcn_block(s_h1, s_uv_ref[...], w3ms_ref[...], b3ms_ref[...], alpha)  # (n_u, 2F)
    t_h1 = _gcn_block(t_fea, t_vu_ref[...], w2_ref[...], b2_ref[...], alpha)
    t_ms = _gcn_block(t_h1, t_uv_ref[...], w4ms_ref[...], b4ms_ref[...], alpha)  # (n_u, 2F)

    # [s_mean | s_logstd | s_fea | t_mean | t_logstd | t_fea] -> (n_u, 6F) scratch.
    cat_ref[:, 0 * f_dim:2 * f_dim] = s_ms
    cat_ref[:, 2 * f_dim:3 * f_dim] = s_fea
    cat_ref[:, 3 * f_dim:5 * f_dim] = t_ms
    cat_ref[:, 5 * f_dim:6 * f_dim] = t_fea

    # One (n, 6F) @ (6F, 4F) matmul -> all four union projections (128 lanes).
    v = jnp.dot(cat_ref[...].astype(jnp.bfloat16), wmix_ref[...],
                preferred_element_type=jnp.float32) + bmix_ref[...]              # (n_u, 4F)
    s_mean_u = v[:, 0 * f_dim:1 * f_dim]
    s_logstd_u = v[:, 1 * f_dim:2 * f_dim]
    t_mean_u = v[:, 2 * f_dim:3 * f_dim]
    t_logstd_u = v[:, 3 * f_dim:4 * f_dim]

    # No ReLU in the last layer; rate-mix in f32.
    o_ref[:, :f_dim] = rate * s_mean_u + (1.0 - rate) * t_mean_u
    o_ref[:, f_dim:] = rate * s_logstd_u + (1.0 - rate) * t_logstd_u


def last_layer_cross(fp, s_fea, t_fea, s_UV, s_VU, t_UV, t_VU,
                     *, alpha=ALPHA, rate=RATE):
    n_u, f_dim = s_fea.shape
    n_i = s_VU.shape[0]
    h_dim = fp['w1'].shape[1]

    flops = int(2 * 2 * (n_u * f_dim * h_dim + n_i * n_u * h_dim
                         + n_i * h_dim * 2 * f_dim + n_u * n_i * 2 * f_dim)
                + 2 * n_u * (6 * f_dim) * (4 * f_dim))
    args = (s_fea, t_fea, s_UV, s_VU, t_UV, t_VU,
            fp['w1'], fp['b1'], fp['w2'], fp['b2'],
            fp['w3ms'], fp['b3ms'], fp['w4ms'], fp['b4ms'],
            fp['wmix'], fp['bmix'])
    cost = pl.CostEstimate(flops=flops, transcendentals=0,
                           bytes_accessed=_nbytes(*args) + n_u * 2 * f_dim * 4)

    out = pl.pallas_call(
        functools.partial(_last_layer_kernel, alpha=alpha, rate=rate, f_dim=f_dim),
        out_shape=jax.ShapeDtypeStruct((n_u, 2 * f_dim), jnp.float32),
        in_specs=[_VMEM] * 16,
        out_specs=_VMEM,
        scratch_shapes=[pltpu.VMEM((n_u, 6 * f_dim), jnp.float32)],
        compiler_params=pltpu.CompilerParams(vmem_limit_bytes=_VMEM_LIMIT),
        cost_estimate=cost,
    )(*args)
    mean = out[:, :f_dim]
    sigma = out[:, f_dim:]
    return mean, sigma


# --------------------------------------------------------------------------
# Parameter initialization (deterministic, PyTorch Linear-style uniform)
# --------------------------------------------------------------------------
def init_linear(key, fan_in, fan_out):
    kw, kb = jax.random.split(key)
    bound = 1.0 / jnp.sqrt(jnp.float32(fan_in))
    w = jax.random.uniform(kw, (fan_in, fan_out), jnp.float32, -bound, bound)
    b = jax.random.uniform(kb, (fan_out,), jnp.float32, -bound, bound)
    return w, b


def init_dgcn_layer(key, F, H):
    ks = jax.random.split(key, 6)
    p = {}
    p['gc1_w'], p['gc1_b'] = init_linear(ks[0], F, H)
    p['gc2_w'], p['gc2_b'] = init_linear(ks[1], F, H)
    p['gc3_w'], p['gc3_b'] = init_linear(ks[2], H, F)
    p['gc4_w'], p['gc4_b'] = init_linear(ks[3], H, F)
    p['us_w'], p['us_b'] = init_linear(ks[4], 2 * F, F)
    p['ut_w'], p['ut_b'] = init_linear(ks[5], 2 * F, F)
    return p


def init_last_layer(key, F, H):
    ks = jax.random.split(key, 10)
    p = {}
    p['gc1_w'], p['gc1_b'] = init_linear(ks[0], F, H)
    p['gc2_w'], p['gc2_b'] = init_linear(ks[1], F, H)
    p['gc3m_w'], p['gc3m_b'] = init_linear(ks[2], H, F)
    p['gc3s_w'], p['gc3s_b'] = init_linear(ks[3], H, F)
    p['gc4m_w'], p['gc4m_b'] = init_linear(ks[4], H, F)
    p['gc4s_w'], p['gc4s_b'] = init_linear(ks[5], H, F)
    p['usm_w'], p['usm_b'] = init_linear(ks[6], 2 * F, F)
    p['uss_w'], p['uss_b'] = init_linear(ks[7], 2 * F, F)
    p['utm_w'], p['utm_b'] = init_linear(ks[8], 2 * F, F)
    p['uts_w'], p['uts_b'] = init_linear(ks[9], 2 * F, F)
    return p


# --------------------------------------------------------------------------
# One-time weight fusion (done at init, not per forward)
# --------------------------------------------------------------------------
def fuse_dgcn_layer_params(p):
    """Raw DGCNLayer_cross params -> fused kernel-ready params (bf16 weights)."""
    F = p['gc3_w'].shape[1]
    bf = jnp.bfloat16
    Z = jnp.zeros((2 * F, F), jnp.float32)
    # Input order is [s_h2 | s_fea | t_h2 | t_fea]; block-diagonal union weight.
    wu = jnp.concatenate([jnp.concatenate([p['us_w'], Z], axis=1),
                          jnp.concatenate([Z, p['ut_w']], axis=1)], axis=0)   # (4F, 2F)
    bu = jnp.concatenate([p['us_b'], p['ut_b']])                              # (2F,)
    return {
        'w1': p['gc1_w'].astype(bf), 'b1': p['gc1_b'].reshape(1, -1),
        'w2': p['gc2_w'].astype(bf), 'b2': p['gc2_b'].reshape(1, -1),
        'w3': p['gc3_w'].astype(bf), 'b3': p['gc3_b'].reshape(1, -1),
        'w4': p['gc4_w'].astype(bf), 'b4': p['gc4_b'].reshape(1, -1),
        'wu': wu.astype(bf), 'bu': bu.reshape(1, -1),
    }


def fuse_last_layer_params(p):
    """Raw LastLayer_cross params -> fused kernel-ready params (bf16 weights)."""
    F = p['gc3m_w'].shape[1]
    bf = jnp.bfloat16
    w3ms = jnp.concatenate([p['gc3m_w'], p['gc3s_w']], axis=1)   # (H, 2F)
    b3ms = jnp.concatenate([p['gc3m_b'], p['gc3s_b']])
    w4ms = jnp.concatenate([p['gc4m_w'], p['gc4s_w']], axis=1)
    b4ms = jnp.concatenate([p['gc4m_b'], p['gc4s_b']])

    # Input order: [s_mean | s_logstd | s_fea | t_mean | t_logstd | t_fea]
    # Output order: [s_mean_u | s_logstd_u | t_mean_u | t_logstd_u]
    Z = jnp.zeros((F, F), jnp.float32)
    usm, uss, utm, uts = p['usm_w'], p['uss_w'], p['utm_w'], p['uts_w']
    wmix = jnp.concatenate([
        jnp.concatenate([usm[:F], Z, Z, Z], axis=1),          # s_mean rows
        jnp.concatenate([Z, uss[:F], Z, Z], axis=1),          # s_logstd rows
        jnp.concatenate([usm[F:], uss[F:], Z, Z], axis=1),    # s_fea rows
        jnp.concatenate([Z, Z, utm[:F], Z], axis=1),          # t_mean rows
        jnp.concatenate([Z, Z, Z, uts[:F]], axis=1),          # t_logstd rows
        jnp.concatenate([Z, Z, utm[F:], uts[F:]], axis=1),    # t_fea rows
    ], axis=0)                                                # (6F, 4F)
    bmix = jnp.concatenate([p['usm_b'], p['uss_b'], p['utm_b'], p['uts_b']])  # (4F,)

    return {
        'w1': p['gc1_w'].astype(bf), 'b1': p['gc1_b'].reshape(1, -1),
        'w2': p['gc2_w'].astype(bf), 'b2': p['gc2_b'].reshape(1, -1),
        'w3ms': w3ms.astype(bf), 'b3ms': b3ms.reshape(1, -1),
        'w4ms': w4ms.astype(bf), 'b4ms': b4ms.reshape(1, -1),
        'wmix': wmix.astype(bf), 'bmix': bmix.reshape(1, -1),
    }


# --------------------------------------------------------------------------
# crossVBGE forward (glue around the two fused kernels)
# --------------------------------------------------------------------------
def cross_vbge_forward(params, s_fea, t_fea, s_UV, s_VU, t_UV, t_VU):
    # F.dropout(..., training=False) is identity in inference mode.
    # bf16 adjacencies: halve HBM/VMEM bytes of the dominant matmul operand;
    # all MXU accumulation stays f32.
    s_UV = s_UV.astype(jnp.bfloat16)
    s_VU = s_VU.astype(jnp.bfloat16)
    t_UV = t_UV.astype(jnp.bfloat16)
    t_VU = t_VU.astype(jnp.bfloat16)

    ls, lt = s_fea, t_fea
    for fp in params['dgcn_layers']:
        ls, lt = dgcn_layer_cross(fp, ls, lt, s_UV, s_VU, t_UV, t_VU)
    mean, sigma = last_layer_cross(params['last'], ls, lt, s_UV, s_VU, t_UV, t_VU)
    return mean, sigma


# --------------------------------------------------------------------------
if __name__ == "__main__":
    # opt = {feature_dim: 32, hidden_dim: 16, GNN: 2, leaky: 0.2, rate: 0.7, dropout: 0.3}
    F_DIM, H_DIM, N_LAYERS = 32, 16, 2
    N_USERS, N_ITEMS = 8, 16

    key = jax.random.PRNGKey(0)
    k_par, k_sfea, k_tfea, k_suv, k_tuv = jax.random.split(key, 5)

    layer_keys = jax.random.split(k_par, N_LAYERS)
    params = {
        'dgcn_layers': [fuse_dgcn_layer_params(init_dgcn_layer(layer_keys[i], F_DIM, H_DIM))
                        for i in range(N_LAYERS - 1)],
        'last': fuse_last_layer_params(init_last_layer(layer_keys[-1], F_DIM, H_DIM)),
    }

    source_ufea = jax.random.normal(k_sfea, (N_USERS, F_DIM), jnp.float32)
    target_ufea = jax.random.normal(k_tfea, (N_USERS, F_DIM), jnp.float32)

    # Dense (row-normalized) bipartite adjacencies; VU = UV^T before normalization.
    src_uv_raw = (jax.random.uniform(k_suv, (N_USERS, N_ITEMS)) > 0.5).astype(jnp.float32)
    tgt_uv_raw = (jax.random.uniform(k_tuv, (N_USERS, N_ITEMS)) > 0.5).astype(jnp.float32)

    def row_norm(a):
        return a / jnp.clip(a.sum(axis=1, keepdims=True), 1.0, None)

    source_UV_adj = row_norm(src_uv_raw)            # (n_users, n_items)
    source_VU_adj = row_norm(src_uv_raw.T)          # (n_items, n_users)
    target_UV_adj = row_norm(tgt_uv_raw)
    target_VU_adj = row_norm(tgt_uv_raw.T)

    mean, sigma = cross_vbge_forward(params, source_ufea, target_ufea,
                                     source_UV_adj, source_VU_adj,
                                     target_UV_adj, target_VU_adj)
    jax.block_until_ready((mean, sigma))
    assert mean.shape == (N_USERS, F_DIM) and sigma.shape == (N_USERS, F_DIM)
    assert bool(jnp.all(jnp.isfinite(mean))) and bool(jnp.all(jnp.isfinite(sigma)))
    print("KERNEL_OK")
</pallas_src>

<mosaic_0001>
module attributes {stable_mosaic.version = 11 : i64} {
  func.func @_dgcn_layer_kernel(%arg0: memref<8x32xf32, #tpu.memory_space<vmem>>, %arg1: memref<8x32xf32, #tpu.memory_space<vmem>>, %arg2: memref<8x16xbf16, #tpu.memory_space<vmem>>, %arg3: memref<16x8xbf16, #tpu.memory_space<vmem>>, %arg4: memref<8x16xbf16, #tpu.memory_space<vmem>>, %arg5: memref<16x8xbf16, #tpu.memory_space<vmem>>, %arg6: memref<32x16xbf16, #tpu.memory_space<vmem>>, %arg7: memref<1x16xf32, #tpu.memory_space<vmem>>, %arg8: memref<32x16xbf16, #tpu.memory_space<vmem>>, %arg9: memref<1x16xf32, #tpu.memory_space<vmem>>, %arg10: memref<16x32xbf16, #tpu.memory_space<vmem>>, %arg11: memref<1x32xf32, #tpu.memory_space<vmem>>, %arg12: memref<16x32xbf16, #tpu.memory_space<vmem>>, %arg13: memref<1x32xf32, #tpu.memory_space<vmem>>, %arg14: memref<128x64xbf16, #tpu.memory_space<vmem>>, %arg15: memref<1x64xf32, #tpu.memory_space<vmem>>, %arg16: memref<8x32xf32, #tpu.memory_space<vmem>>, %arg17: memref<8x128xf32, #tpu.memory_space<vmem>>) attributes {dimension_semantics = [], scalar_prefetch = 0 : i64, scratch_operands = 1 : i64, tpu.core_type = #tpu.core_type<tc>} {
    %c0 = arith.constant 0 : index
    %c0_0 = arith.constant 0 : index
    %0 = vector.load %arg0[%c0, %c0_0] : memref<8x32xf32, #tpu.memory_space<vmem>>, vector<8x32xf32>
    %c0_1 = arith.constant 0 : index
    %c0_2 = arith.constant 0 : index
    %1 = vector.load %arg1[%c0_1, %c0_2] : memref<8x32xf32, #tpu.memory_space<vmem>>, vector<8x32xf32>
    %c0_3 = arith.constant 0 : index
    %c0_4 = arith.constant 0 : index
    %2 = vector.load %arg3[%c0_3, %c0_4] : memref<16x8xbf16, #tpu.memory_space<vmem>>, vector<16x8xbf16>
    %c0_5 = arith.constant 0 : index
    %c0_6 = arith.constant 0 : index
    %3 = vector.load %arg6[%c0_5, %c0_6] : memref<32x16xbf16, #tpu.memory_space<vmem>>, vector<32x16xbf16>
    %c0_7 = arith.constant 0 : index
    %c0_8 = arith.constant 0 : index
    %4 = vector.load %arg7[%c0_7, %c0_8] : memref<1x16xf32, #tpu.memory_space<vmem>>, vector<1x16xf32>
    %5 = arith.truncf %0 : vector<8x32xf32> to vector<8x32xbf16>
    %cst = arith.constant dense<0.000000e+00> : vector<8x16xf32>
    %6 = tpu.matmul %5, %3, %cst {dimension_numbers = #tpu.dot_dimension_numbers<[1], [0], [0], [1], [0, 0, 1, 1], [], []>} : vector<8x32xbf16>, vector<32x16xbf16>, vector<8x16xf32> -> vector<8x16xf32>
    %7 = arith.truncf %6 : vector<8x16xf32> to vector<8x16xbf16>
    %cst_9 = arith.constant dense<0.000000e+00> : vector<16x16xf32>
    %8 = tpu.matmul %2, %7, %cst_9 {dimension_numbers = #tpu.dot_dimension_numbers<[1], [0], [0], [1], [0, 0, 1, 1], [], []>} : vector<16x8xbf16>, vector<8x16xbf16>, vector<16x16xf32> -> vector<16x16xf32>
    %9 = vector.broadcast %4 : vector<1x16xf32> to vector<16x16xf32>
    %10 = arith.addf %8, %9 : vector<16x16xf32>
    %cst_10 = arith.constant 0.000000e+00 : f32
    %11 = vector.broadcast %cst_10 : f32 to vector<16x16xf32>
    %12 = arith.cmpf ogt, %10, %11 : vector<16x16xf32>
    %cst_11 = arith.constant 2.000000e-01 : f32
    %13 = vector.broadcast %cst_11 : f32 to vector<16x16xf32>
    %14 = arith.mulf %13, %10 : vector<16x16xf32>
    %15 = arith.select %12, %10, %14 : vector<16x16xi1>, vector<16x16xf32>
    %c0_12 = arith.constant 0 : index
    %c0_13 = arith.constant 0 : index
    %16 = vector.load %arg2[%c0_12, %c0_13] : memref<8x16xbf16, #tpu.memory_space<vmem>>, vector<8x16xbf16>
    %c0_14 = arith.constant 0 : index
    %c0_15 = arith.constant 0 : index
    %17 = vector.load %arg10[%c0_14, %c0_15] : memref<16x32xbf16, #tpu.memory_space<vmem>>, vector<16x32xbf16>
    %c0_16 = arith.constant 0 : index
    %c0_17 = arith.constant 0 : index
    %18 = vector.load %arg11[%c0_16, %c0_17] : memref<1x32xf32, #tpu.memory_space<vmem>>, vector<1x32xf32>
    %19 = arith.truncf %15 : vector<16x16xf32> to vector<16x16xbf16>
    %cst_18 = arith.constant dense<0.000000e+00> : vector<16x32xf32>
    %20 = tpu.matmul %19, %17, %cst_18 {dimension_numbers = #tpu.dot_dimension_numbers<[1], [0], [0], [1], [0, 0, 1, 1], [], []>} : vector<16x16xbf16>, vector<16x32xbf16>, vector<16x32xf32> -> vector<16x32xf32>
    %21 = arith.truncf %20 : vector<16x32xf32> to vector<16x32xbf16>
    %cst_19 = arith.constant dense<0.000000e+00> : vector<8x32xf32>
    %22 = tpu.matmul %16, %21, %cst_19 {dimension_numbers = #tpu.dot_dimension_numbers<[1], [0], [0], [1], [0, 0, 1, 1], [], []>} : vector<8x16xbf16>, vector<16x32xbf16>, vector<8x32xf32> -> vector<8x32xf32>
    %23 = vector.broadcast %18 : vector<1x32xf32> to vector<8x32xf32>
    %24 = arith.addf %22, %23 : vector<8x32xf32>
    %cst_20 = arith.constant 0.000000e+00 : f32
    %25 = vector.broadcast %cst_20 : f32 to vector<8x32xf32>
    %26 = arith.cmpf ogt, %24, %25 : vector<8x32xf32>
    %cst_21 = arith.constant 2.000000e-01 : f32
    %27 = vector.broadcast %cst_21 : f32 to vector<8x32xf32>
    %28 = arith.mulf %27, %24 : vector<8x32xf32>
    %29 = arith.select %26, %24, %28 : vector<8x32xi1>, vector<8x32xf32>
    %c0_22 = arith.constant 0 : index
    %c0_23 = arith.constant 0 : index
    %30 = vector.load %arg5[%c0_22, %c0_23] : memref<16x8xbf16, #tpu.memory_space<vmem>>, vector<16x8xbf16>
    %c0_24 = arith.constant 0 : index
    %c0_25 = arith.constant 0 : index
    %31 = vector.load %arg8[%c0_24, %c0_25] : memref<32x16xbf16, #tpu.memory_space<vmem>>, vector<32x16xbf16>
    %c0_26 = arith.constant 0 : index
    %c0_27 = arith.constant 0 : index
    %32 = vector.load %arg9[%c0_26, %c0_27] : memref<1x16xf32, #tpu.memory_space<vmem>>, vector<1x16xf32>
    %33 = arith.truncf %1 : vector<8x32xf32> to vector<8x32xbf16>
    %cst_28 = arith.constant dense<0.000000e+00> : vector<8x16xf32>
    %34 = tpu.matmul %33, %31, %cst_28 {dimension_numbers = #tpu.dot_dimension_numbers<[1], [0], [0], [1], [0, 0, 1, 1], [], []>} : vector<8x32xbf16>, vector<32x16xbf16>, vector<8x16xf32> -> vector<8x16xf32>
    %35 = arith.truncf %34 : vector<8x16xf32> to vector<8x16xbf16>
    %cst_29 = arith.constant dense<0.000000e+00> : vector<16x16xf32>
    %36 = tpu.matmul %30, %35, %cst_29 {dimension_numbers = #tpu.dot_dimension_numbers<[1], [0], [0], [1], [0, 0, 1, 1], [], []>} : vector<16x8xbf16>, vector<8x16xbf16>, vector<16x16xf32> -> vector<16x16xf32>
    %37 = vector.broadcast %32 : vector<1x16xf32> to vector<16x16xf32>
    %38 = arith.addf %36, %37 : vector<16x16xf32>
    %cst_30 = arith.constant 0.000000e+00 : f32
    %39 = vector.broadcast %cst_30 : f32 to vector<16x16xf32>
    %40 = arith.cmpf ogt, %38, %39 : vector<16x16xf32>
    %cst_31 = arith.constant 2.000000e-01 : f32
    %41 = vector.broadcast %cst_31 : f32 to vector<16x16xf32>
    %42 = arith.mulf %41, %38 : vector<16x16xf32>
    %43 = arith.select %40, %38, %42 : vector<16x16xi1>, vector<16x16xf32>
    %c0_32 = arith.constant 0 : index
    %c0_33 = arith.constant 0 : index
    %44 = vector.load %arg4[%c0_32, %c0_33] : memref<8x16xbf16, #tpu.memory_space<vmem>>, vector<8x16xbf16>
    %c0_34 = arith.constant 0 : index
    %c0_35 = arith.constant 0 : index
    %45 = vector.load %arg12[%c0_34, %c0_35] : memref<16x32xbf16, #tpu.memory_space<vmem>>, vector<16x32xbf16>
    %c0_36 = arith.constant 0 : index
    %c0_37 = arith.constant 0 : index
    %46 = vector.load %arg13[%c0_36, %c0_37] : memref<1x32xf32, #tpu.memory_space<vmem>>, vector<1x32xf32>
    %47 = arith.truncf %43 : vector<16x16xf32> to vector<16x16xbf16>
    %cst_38 = arith.constant dense<0.000000e+00> : vector<16x32xf32>
    %48 = tpu.matmul %47, %45, %cst_38 {dimension_numbers = #tpu.dot_dimension_numbers<[1], [0], [0], [1], [0, 0, 1, 1], [], []>} : vector<16x16xbf16>, vector<16x32xbf16>, vector<16x32xf32> -> vector<16x32xf32>
    %49 = arith.truncf %48 : vector<16x32xf32> to vector<16x32xbf16>
    %cst_39 = arith.constant dense<0.000000e+00> : vector<8x32xf32>
    %50 = tpu.matmul %44, %49, %cst_39 {dimension_numbers = #tpu.dot_dimension_numbers<[1], [0], [0], [1], [0, 0, 1, 1], [], []>} : vector<8x16xbf16>, vector<16x32xbf16>, vector<8x32xf32> -> vector<8x32xf32>
    %51 = vector.broadcast %46 : vector<1x32xf32> to vector<8x32xf32>
    %52 = arith.addf %50, %51 : vector<8x32xf32>
    %cst_40 = arith.constant 0.000000e+00 : f32
    %53 = vector.broadcast %cst_40 : f32 to vector<8x32xf32>
    %54 = arith.cmpf ogt, %52, %53 : vector<8x32xf32>
    %cst_41 = arith.constant 2.000000e-01 : f32
    %55 = vector.broadcast %cst_41 : f32 to vector<8x32xf32>
    %56 = arith.mulf %55, %52 : vector<8x32xf32>
    %57 = arith.select %54, %52, %56 : vector<8x32xi1>, vector<8x32xf32>
    %c0_42 = arith.constant 0 : index
    %c0_43 = arith.constant 0 : index
    %58 = vector.load %arg17[%c0_42, %c0_43] : memref<8x128xf32, #tpu.memory_space<vmem>>, vector<8x32xf32>
    tpu.vector_store %arg17[%c0_42, %c0_43], %29 {strides = array<i32>} : memref<8x128xf32, #tpu.memory_space<vmem>>, vector<8x32xf32>,
    %c0_44 = arith.constant 0 : index
    %c32 = arith.constant 32 : index
    %59 = vector.load %arg17[%c0_44, %c32] : memref<8x128xf32, #tpu.memory_space<vmem>>, vector<8x32xf32>
    tpu.vector_store %arg17[%c0_44, %c32], %0 {strides = array<i32>} : memref<8x128xf32, #tpu.memory_space<vmem>>, vector<8x32xf32>,
    %c0_45 = arith.constant 0 : index
    %c64 = arith.constant 64 : index
    %60 = vector.load %arg17[%c0_45, %c64] : memref<8x128xf32, #tpu.memory_space<vmem>>, vector<8x32xf32>
    tpu.vector_store %arg17[%c0_45, %c64], %57 {strides = array<i32>} : memref<8x128xf32, #tpu.memory_space<vmem>>, vector<8x32xf32>,
    %c0_46 = arith.constant 0 : index
    %c96 = arith.constant 96 : index
    %61 = vector.load %arg17[%c0_46, %c96] : memref<8x128xf32, #tpu.memory_space<vmem>>, vector<8x32xf32>
    tpu.vector_store %arg17[%c0_46, %c96], %1 {strides = array<i32>} : memref<8x128xf32, #tpu.memory_space<vmem>>, vector<8x32xf32>,
    %c0_47 = arith.constant 0 : index
    %c0_48 = arith.constant 0 : index
    %62 = vector.load %arg17[%c0_47, %c0_48] : memref<8x128xf32, #tpu.memory_space<vmem>>, vector<8x128xf32>
    %63 = arith.truncf %62 : vector<8x128xf32> to vector<8x128xbf16>
    %c0_49 = arith.constant 0 : index
    %c0_50 = arith.constant 0 : index
    %64 = vector.load %arg14[%c0_49, %c0_50] : memref<128x64xbf16, #tpu.memory_space<vmem>>, vector<128x64xbf16>
    %cst_51 = arith.constant dense<0.000000e+00> : vector<8x64xf32>
    %65 = tpu.matmul %63, %64, %cst_51 {dimension_numbers = #tpu.dot_dimension_numbers<[1], [0], [0], [1], [0, 0, 1, 1], [], []>} : vector<8x128xbf16>, vector<128x64xbf16>, vector<8x64xf32> -> vector<8x64xf32>
    %c0_52 = arith.constant 0 : index
    %c0_53 = arith.constant 0 : index
    %66 = vector.load %arg15[%c0_52, %c0_53] : memref<1x64xf32, #tpu.memory_space<vmem>>, vector<1x64xf32>
    %67 = vector.broadcast %66 : vector<1x64xf32> to vector<8x64xf32>
    %68 = arith.addf %65, %67 : vector<8x64xf32>
    %69 = vector.extract_strided_slice %68 {offsets = [0, 0], sizes = [8, 32], strides = [1, 1]} : vector<8x64xf32> to vector<8x32xf32>
    %cst_54 = arith.constant 0.000000e+00 : f32
    %70 = vector.broadcast %cst_54 : f32 to vector<8x32xf32>
    %71 = arith.maximumf %69, %70 : vector<8x32xf32>
    %72 = vector.extract_strided_slice %68 {offsets = [0, 32], sizes = [8, 32], strides = [1, 1]} : vector<8x64xf32> to vector<8x32xf32>
    %cst_55 = arith.constant 0.000000e+00 : f32
    %73 = vector.broadcast %cst_55 : f32 to vector<8x32xf32>
    %74 = arith.maximumf %72, %73 : vector<8x32xf32>
    %cst_56 = arith.constant 0.699999988 : f32
    %75 = vector.broadcast %cst_56 : f32 to vector<8x32xf32>
    %76 = arith.mulf %75, %71 : vector<8x32xf32>
    %cst_57 = arith.constant 3.000000e-01 : f32
    %77 = vector.broadcast %cst_57 : f32 to vector<8x32xf32>
    %78 = arith.mulf %77, %74 : vector<8x32xf32>
    %79 = arith.addf %76, %78 : vector<8x32xf32>
    %c0_58 = arith.constant 0 : index
    %c0_59 = arith.constant 0 : index
    %80 = vector.load %arg16[%c0_58, %c0_59] : memref<8x32xf32, #tpu.memory_space<vmem>>, vector<8x32xf32>
    tpu.vector_store %arg16[%c0_58, %c0_59], %79 {strides = array<i32>} : memref<8x32xf32, #tpu.memory_space<vmem>>, vector<8x32xf32>,
    return
  }
}

</mosaic_0001>

<llo_original>
// kernel: tpu_custom_call.1
$region0: #{tpu_custom_call.1}
  #allocation0 [shape = 'u32[]', space=smem, size = 0x4, offset = 0x4, fixed_abs, tag = 'smem constant byte address 0x4 - core index']
  #allocation1 [shape = 'u32[144,128]{1,0:T(1,128)}', space=vmem, size = 0x12000, scoped, tag = 'internal scratch']
  #allocation2 [shape = 'f32[8,128]{1,0:T(8,128)}', space=vmem, size = 0x1000, scoped, tag = 'scratch operand']
  %s0 = inlined_call_operand.vmem [shape: f32[8,32], index: 0, kind: input, shape index: {}]
  %s1 = inlined_call_operand.vmem [shape: f32[8,32], index: 1, kind: input, shape index: {}]
  %s2 = inlined_call_operand.vmem [shape: bf16[8,16], index: 2, kind: input, shape index: {}]
  %s3 = inlined_call_operand.vmem [shape: bf16[16,8], index: 3, kind: input, shape index: {}]
  %s4 = inlined_call_operand.vmem [shape: bf16[8,16], index: 4, kind: input, shape index: {}]
  %s5 = inlined_call_operand.vmem [shape: bf16[16,8], index: 5, kind: input, shape index: {}]
  %s6 = inlined_call_operand.vmem [shape: bf16[32,16], index: 6, kind: input, shape index: {}]
  %s7 = inlined_call_operand.vmem [shape: f32[1,16], index: 7, kind: input, shape index: {}]
  %s8 = inlined_call_operand.vmem [shape: bf16[32,16], index: 8, kind: input, shape index: {}]
  %s9 = inlined_call_operand.vmem [shape: f32[1,16], index: 9, kind: input, shape index: {}]
  %s10 = inlined_call_operand.vmem [shape: bf16[16,32], index: 10, kind: input, shape index: {}]
  %s11 = inlined_call_operand.vmem [shape: f32[1,32], index: 11, kind: input, shape index: {}]
  %s12 = inlined_call_operand.vmem [shape: bf16[16,32], index: 12, kind: input, shape index: {}]
  %s13 = inlined_call_operand.vmem [shape: f32[1,32], index: 13, kind: input, shape index: {}]
  %s14 = inlined_call_operand.vmem [shape: bf16[128,64], index: 14, kind: input, shape index: {}]
  %s15 = inlined_call_operand.vmem [shape: f32[1,64], index: 15, kind: input, shape index: {}]
  %s16 = inlined_call_operand.hbm [shape: f32[8,32], index: 16, kind: output, shape index: {}]
  %s17 = sld [smem:[#allocation0]]
  $region74: #{tpu_custom_call.1} parent=0
    _
  %s19 = ssub.s32 1, %s17
  %s20 = scalar_select 0, %s19, %s17
  $region1: #{tpu_custom_call.1} parent=0
    #allocation3 [shape = 'u8[4096]{0}', space=vmem, size = 0x1000, scoped, tag = 'output window, operand 0, single buffered']
    #allocation4 [shape = 's32[1]{0}', space=sflag, size = 0x4, scoped, tag = 'scoped memory for tpu_custom_call.1']
    %21 = vsyncpa [#allocation4], 0
    // Predicated region
    $region2: #{tpu_custom_call.1} parent=1 // pred_check
      _
    $region3: #{tpu_custom_call.1} parent=1 // pred_check_branch
      %23 = sbr.rel (0) target = $region5
    $region4: #{tpu_custom_call.1} parent=1 // pred_region
      _
    $region5: #{tpu_custom_call.1} parent=1 // pred_fallthru
      _
    // Predicated region
    $region6: #{tpu_custom_call.1} parent=1 // pred_check
      _
    $region7: #{tpu_custom_call.1} parent=1 // pred_check_branch
      %25 = sbr.rel (0) target = $region9
    $region8: #{tpu_custom_call.1} parent=1 // pred_region
      _
    $region9: #{tpu_custom_call.1} parent=1 // pred_fallthru
      _
    // Predicated region
    $region10: #{tpu_custom_call.1} parent=1 // pred_check
      _
    $region11: #{tpu_custom_call.1} parent=1 // pred_check_branch
      %27 = sbr.rel (0) target = $region13
    $region12: #{tpu_custom_call.1} parent=1 // pred_region
      _
    $region13: #{tpu_custom_call.1} parent=1 // pred_fallthru
      _
    // Predicated region
    $region14: #{tpu_custom_call.1} parent=1 // pred_check
      _
    $region15: #{tpu_custom_call.1} parent=1 // pred_check_branch
      %29 = sbr.rel (0) target = $region17
    $region16: #{tpu_custom_call.1} parent=1 // pred_region
      _
    $region17: #{tpu_custom_call.1} parent=1 // pred_fallthru
      _
    // Predicated region
    $region18: #{tpu_custom_call.1} parent=1 // pred_check
      _
    $region19: #{tpu_custom_call.1} parent=1 // pred_check_branch
      %31 = sbr.rel (0) target = $region21
    $region20: #{tpu_custom_call.1} parent=1 // pred_region
      _
    $region21: #{tpu_custom_call.1} parent=1 // pred_fallthru
      _
    // Predicated region
    $region22: #{tpu_custom_call.1} parent=1 // pred_check
      _
    $region23: #{tpu_custom_call.1} parent=1 // pred_check_branch
      %33 = sbr.rel (0) target = $region25
    $region24: #{tpu_custom_call.1} parent=1 // pred_region
      _
    $region25: #{tpu_custom_call.1} parent=1 // pred_fallthru
      _
    // Predicated region
    $region26: #{tpu_custom_call.1} parent=1 // pred_check
      _
    $region27: #{tpu_custom_call.1} parent=1 // pred_check_branch
      %35 = sbr.rel (0) target = $region29
    $region28: #{tpu_custom_call.1} parent=1 // pred_region
      _
    $region29: #{tpu_custom_call.1} parent=1 // pred_fallthru
      _
    // Predicated region
    $region30: #{tpu_custom_call.1} parent=1 // pred_check
      _
    $region31: #{tpu_custom_call.1} parent=1 // pred_check_branch
      %37 = sbr.rel (0) target = $region33
    $region32: #{tpu_custom_call.1} parent=1 // pred_region
      _
    $region33: #{tpu_custom_call.1} parent=1 // pred_fallthru
      _
    // Predicated region
    $region34: #{tpu_custom_call.1} parent=1 // pred_check
      _
    $region35: #{tpu_custom_call.1} parent=1 // pred_check_branch
      %39 = sbr.rel (0) target = $region37
    $region36: #{tpu_custom_call.1} parent=1 // pred_region
      _
    $region37: #{tpu_custom_call.1} parent=1 // pred_fallthru
      _
    // Predicated region
    $region38: #{tpu_custom_call.1} parent=1 // pred_check
      _
    $region39: #{tpu_custom_call.1} parent=1 // pred_check_branch
      %41 = sbr.rel (0) target = $region41
    $region40: #{tpu_custom_call.1} parent=1 // pred_region
      _
    $region41: #{tpu_custom_call.1} parent=1 // pred_fallthru
      _
    // Predicated region
    $region42: #{tpu_custom_call.1} parent=1 // pred_check
      _
    $region43: #{tpu_custom_call.1} parent=1 // pred_check_branch
      %43 = sbr.rel (0) target = $region45
    $region44: #{tpu_custom_call.1} parent=1 // pred_region
      _
    $region45: #{tpu_custom_call.1} parent=1 // pred_fallthru
      _
    // Predicated region
    $region46: #{tpu_custom_call.1} parent=1 // pred_check
      _
    $region47: #{tpu_custom_call.1} parent=1 // pred_check_branch
      %45 = sbr.rel (0) target = $region49
    $region48: #{tpu_custom_call.1} parent=1 // pred_region
      _
    $region49: #{tpu_custom_call.1} parent=1 // pred_fallthru
      _
    // Predicated region
    $region50: #{tpu_custom_call.1} parent=1 // pred_check
      _
    $region51: #{tpu_custom_call.1} parent=1 // pred_check_branch
      %47 = sbr.rel (0) target = $region53
    $region52: #{tpu_custom_call.1} parent=1 // pred_region
      _
    $region53: #{tpu_custom_call.1} parent=1 // pred_fallthru
      _
    // Predicated region
    $region54: #{tpu_custom_call.1} parent=1 // pred_check
      _
    $region55: #{tpu_custom_call.1} parent=1 // pred_check_branch
      %49 = sbr.rel (0) target = $region57
    $region56: #{tpu_custom_call.1} parent=1 // pred_region
      _
    $region57: #{tpu_custom_call.1} parent=1 // pred_fallthru
      _
    // Predicated region
    $region58: #{tpu_custom_call.1} parent=1 // pred_check
      _
    $region59: #{tpu_custom_call.1} parent=1 // pred_check_branch
      %51 = sbr.rel (0) target = $region61
    $region60: #{tpu_custom_call.1} parent=1 // pred_region
      _
    $region61: #{tpu_custom_call.1} parent=1 // pred_fallthru
      _
    // Predicated region
    $region62: #{tpu_custom_call.1} parent=1 // pred_check
      _
    $region63: #{tpu_custom_call.1} parent=1 // pred_check_branch
      %53 = sbr.rel (0) target = $region65
    $region64: #{tpu_custom_call.1} parent=1 // pred_region
      _
    $region65: #{tpu_custom_call.1} parent=1 // pred_fallthru
      _
    %v55 = vld [vmem:[%s0] sm:$0xff]
    %v56 = vld [vmem:[%s1] sm:$0xff]
    %v57 = vld [vmem:[%s3] sm:$0xf]
    %v58 = vld [vmem:[%s3 + $0x4] sm:$0xf]
    %v59 = vld [vmem:[%s6] sm:$0xf]
    %v60 = vld [vmem:[%s6 + $0x4] sm:$0xf]
    %v61 = vld [vmem:[%s6 + $0x8] sm:$0xf]
    %v62 = vld [vmem:[%s6 + $0xc] sm:$0xf]
    %v63 = vld [vmem:[%s7] sm:$0x1]
    %v64 = vpack.c.bf16 %v55, %v55
    %v69 = vunpack.c.l.b16 %v59
    %v70 = vunpack.c.l.b16 %v60
    %v71 = vunpack.c.l.b16 %v61
    %v72 = vunpack.c.l.b16 %v62
    %v73 = vpack.c.b16 %v70, %v69
    %v74 = vpack.c.b16 %v72, %v71
    %vm77 = vcmask 261120
    %v79 = vsel %vm77, %v64, 0
    %81 = vmatprep.subr.bf16.mxu0 0
    %82 = vmatpush1.bf16.msra.mxu0 %v73
    %83 = vmatprep.subr.bf16.mxu0 0
    %84 = vmatpush1.bf16.msra.mxu0 %v74
    %85 = vmatprep.subr.bf16.mxu0 0
    %86 = vmatpush1.bf16.msra.mxu0 0
    %87 = vmatprep.subr.bf16.mxu0 0
    %88 = vmatpush1.bf16.msra.mxu0 0
    %89 = vmatprep.subr.bf16.mxu0 0
    %90 = vmatpush1.bf16.msra.mxu0 0
    %91 = vmatprep.subr.bf16.mxu0 0
    %92 = vmatpush1.bf16.msra.mxu0 0
    %93 = vmatprep.subr.bf16.mxu0 0
    %94 = vmatpush1.bf16.msra.mxu0 0
    %95 = vmatprep.subr.bf16.mxu0 0
    %96 = vmatpush1.bf16.msra.mxu0 0
    %97 = vmatprep.subr.bf16.mxu0 0
    %98 = vmatpush1.bf16.msra.mxu0 0
    %99 = vmatprep.subr.bf16.mxu0 0
    %100 = vmatpush1.bf16.msra.mxu0 0
    %101 = vmatprep.subr.bf16.mxu0 0
    %102 = vmatpush1.bf16.msra.mxu0 0
    %103 = vmatprep.subr.bf16.mxu0 0
    %104 = vmatpush1.bf16.msra.mxu0 0
    %105 = vmatprep.subr.bf16.mxu0 0
    %106 = vmatpush1.bf16.msra.mxu0 0
    %107 = vmatprep.subr.bf16.mxu0 0
    %108 = vmatpush1.bf16.msra.mxu0 0
    %109 = vmatprep.subr.bf16.mxu0 0
    %110 = vmatpush1.bf16.msra.mxu0 0
    %111 = vmatprep.subr.bf16.mxu0 0
    %112 = vmatpush1.bf16.msra.mxu0 0
    %113 = vmatprep.mubr.bf16.mxu0 0
    %114 = vmatmul.mubr.bf16.gmra.mrb[0].mxu0 %v79
    %v115 = vpop.f32.mrb[0].mxu0
    %v116 = vadd.f32 0.0, %v115
    %v117 = vpop.f32.mrb[0].mxu0
    %v118 = vpop.f32.mrb[0].mxu0
    %v119 = vpop.f32.mrb[0].mxu0
    %120 = vdwg.mxu0
    %v121 = vpack.c.bf16 %v116, %v116
    %v123 = vlaneseq
    %v124 = vshrl.u32 %v123, 7
    %v125 = vsub.s32 0, %v124
    %v126 = vrot.slane %v63, %v125
    %v130 = vunpack.c.l.b16 %v57
    %v131 = vunpack.c.l.b16 %v58
    %v132 = vpack.c.b16 %v131, %v130
    %vm133 = vcmask 64512
    %v135 = vsel %vm133, %v132, 0
    %vm137 = vcmask 1043456
    %v139 = vsel %vm137, %v121, 0
    %141 = vmatprep.subr.bf16.mxu0 0
    %142 = vmatpush1.bf16.msra.mxu0 %v139
    %143 = vmatprep.subr.bf16.mxu0 0
    %144 = vmatpush1.bf16.msra.mxu0 0
    %145 = vmatprep.subr.bf16.mxu0 0
    %146 = vmatpush1.bf16.msra.mxu0 0
    %147 = vmatprep.subr.bf16.mxu0 0
    %148 = vmatpush1.bf16.msra.mxu0 0
    %149 = vmatprep.subr.bf16.mxu0 0
    %150 = vmatpush1.bf16.msra.mxu0 0
    %151 = vmatprep.subr.bf16.mxu0 0
    %152 = vmatpush1.bf16.msra.mxu0 0
    %153 = vmatprep.subr.bf16.mxu0 0
    %154 = vmatpush1.bf16.msra.mxu0 0
    %155 = vmatprep.subr.bf16.mxu0 0
    %156 = vmatpush1.bf16.msra.mxu0 0
    %157 = vmatprep.subr.bf16.mxu0 0
    %158 = vmatpush1.bf16.msra.mxu0 0
    %159 = vmatprep.subr.bf16.mxu0 0
    %160 = vmatpush1.bf16.msra.mxu0 0
    %161 = vmatprep.subr.bf16.mxu0 0
    %162 = vmatpush1.bf16.msra.mxu0 0
    %163 = vmatprep.subr.bf16.mxu0 0
    %164 = vmatpush1.bf16.msra.mxu0 0
    %165 = vmatprep.subr.bf16.mxu0 0
    %166 = vmatpush1.bf16.msra.mxu0 0
    %167 = vmatprep.subr.bf16.mxu0 0
    %168 = vmatpush1.bf16.msra.mxu0 0
    %169 = vmatprep.subr.bf16.mxu0 0
    %170 = vmatpush1.bf16.msra.mxu0 0
    %171 = vmatprep.subr.bf16.mxu0 0
    %172 = vmatpush1.bf16.msra.mxu0 0
    %173 = vmatprep.mubr.bf16.mxu0 0
    %174 = vmatmul.mubr.bf16.gmra.mrb[0].mxu0 %v135
    %v175 = vpop.f32.mrb[0].mxu0
    %v176 = vadd.f32 %v126, %v175
    %v177 = vpop.f32.mrb[0].mxu0
    %v178 = vpop.f32.mrb[0].mxu0
    %v179 = vadd.f32 %v126, %v178
    %v180 = vpop.f32.mrb[0].mxu0
    %181 = vdwg.mxu0
    %vm182 = vcmp.gt.f32.partialorder %v176, 0.0
    %vm183 = vcmp.gt.f32.partialorder %v179, 0.0
    %v184 = vmul.f32 %v176, 0.2
    %v185 = vmul.f32 %v179, 0.2
    %v186 = vsel %vm182, %v176, %v184
    %v187 = vsel %vm183, %v179, %v185
    %v188 = vld [vmem:[%s2] sm:$0xf]
    %v189 = vld [vmem:[%s10] sm:$0xf]
    %v190 = vld [vmem:[%s10 + $0x4] sm:$0xf]
    %v191 = vld [vmem:[%s11] sm:$0x1]
    %v192 = vpack.c.bf16 %v187, %v186
    %v195 = vunpack.c.l.b16 %v189
    %v196 = vunpack.c.l.b16 %v190
    %v197 = vpack.c.b16 %v196, %v195
    %vm199 = vcmask 130048
    %v201 = vsel %vm199, %v192, 0
    %203 = vmatprep.subr.bf16.mxu0 0
    %204 = vmatpush1.bf16.msra.mxu0 %v197
    %205 = vmatprep.subr.bf16.mxu0 0
    %206 = vmatpush1.bf16.msra.mxu0 0
    %207 = vmatprep.subr.bf16.mxu0 0
    %208 = vmatpush1.bf16.msra.mxu0 0
    %209 = vmatprep.subr.bf16.mxu0 0
    %210 = vmatpush1.bf16.msra.mxu0 0
    %211 = vmatprep.subr.bf16.mxu0 0
    %212 = vmatpush1.bf16.msra.mxu0 0
    %213 = vmatprep.subr.bf16.mxu0 0
    %214 = vmatpush1.bf16.msra.mxu0 0
    %215 = vmatprep.subr.bf16.mxu0 0
    %216 = vmatpush1.bf16.msra.mxu0 0
    %217 = vmatprep.subr.bf16.mxu0 0
    %218 = vmatpush1.bf16.msra.mxu0 0
    %219 = vmatprep.subr.bf16.mxu0 0
    %220 = vmatpush1.bf16.msra.mxu0 0
    %221 = vmatprep.subr.bf16.mxu0 0
    %222 = vmatpush1.bf16.msra.mxu0 0
    %223 = vmatprep.subr.bf16.mxu0 0
    %224 = vmatpush1.bf16.msra.mxu0 0
    %225 = vmatprep.subr.bf16.mxu0 0
    %226 = vmatpush1.bf16.msra.mxu0 0
    %227 = vmatprep.subr.bf16.mxu0 0
    %228 = vmatpush1.bf16.msra.mxu0 0
    %229 = vmatprep.subr.bf16.mxu0 0
    %230 = vmatpush1.bf16.msra.mxu0 0
    %231 = vmatprep.subr.bf16.mxu0 0
    %232 = vmatpush1.bf16.msra.mxu0 0
    %233 = vmatprep.subr.bf16.mxu0 0
    %234 = vmatpush1.bf16.msra.mxu0 0
    %235 = vmatprep.mubr.bf16.mxu0 0
    %236 = vmatmul.mubr.bf16.gmra.mrb[0].mxu0 %v201
    %v237 = vpop.f32.mrb[0].mxu0
    %v238 = vadd.f32 0.0, %v237
    %v239 = vpop.f32.mrb[0].mxu0
    %v240 = vpop.f32.mrb[0].mxu0
    %v241 = vadd.f32 0.0, %v240
    %v242 = vpop.f32.mrb[0].mxu0
    %243 = vdwg.mxu0
    %v244 = vpack.c.bf16 %v241, %v238
    %v246 = vlaneseq
    %v247 = vshrl.u32 %v246, 7
    %v248 = vsub.s32 0, %v247
    %v249 = vrot.slane %v191, %v248
    %v252 = vsel %vm199, %v188, 0
    %254 = vmatprep.subr.bf16.mxu0 0
    %255 = vmatpush1.bf16.msra.mxu0 %v244
    %256 = vmatprep.subr.bf16.mxu0 0
    %257 = vmatpush1.bf16.msra.mxu0 0
    %258 = vmatprep.subr.bf16.mxu0 0
    %259 = vmatpush1.bf16.msra.mxu0 0
    %260 = vmatprep.subr.bf16.mxu0 0
    %261 = vmatpush1.bf16.msra.mxu0 0
    %262 = vmatprep.subr.bf16.mxu0 0
    %263 = vmatpush1.bf16.msra.mxu0 0
    %264 = vmatprep.subr.bf16.mxu0 0
    %265 = vmatpush1.bf16.msra.mxu0 0
    %266 = vmatprep.subr.bf16.mxu0 0
    %267 = vmatpush1.bf16.msra.mxu0 0
    %268 = vmatprep.subr.bf16.mxu0 0
    %269 = vmatpush1.bf16.msra.mxu0 0
    %270 = vmatprep.subr.bf16.mxu0 0
    %271 = vmatpush1.bf16.msra.mxu0 0
    %272 = vmatprep.subr.bf16.mxu0 0
    %273 = vmatpush1.bf16.msra.mxu0 0
    %274 = vmatprep.subr.bf16.mxu0 0
    %275 = vmatpush1.bf16.msra.mxu0 0
    %276 = vmatprep.subr.bf16.mxu0 0
    %277 = vmatpush1.bf16.msra.mxu0 0
    %278 = vmatprep.subr.bf16.mxu0 0
    %279 = vmatpush1.bf16.msra.mxu0 0
    %280 = vmatprep.subr.bf16.mxu0 0
    %281 = vmatpush1.bf16.msra.mxu0 0
    %282 = vmatprep.subr.bf16.mxu0 0
    %283 = vmatpush1.bf16.msra.mxu0 0
    %284 = vmatprep.subr.bf16.mxu0 0
    %285 = vmatpush1.bf16.msra.mxu0 0
    %286 = vmatprep.mubr.bf16.mxu0 0
    %287 = vmatmul.mubr.bf16.gmra.mrb[0].mxu0 %v252
    %v288 = vpop.f32.mrb[0].mxu0
    %v289 = vadd.f32 %v249, %v288
    %v290 = vpop.f32.mrb[0].mxu0
    %v291 = vpop.f32.mrb[0].mxu0
    %v292 = vpop.f32.mrb[0].mxu0
    %293 = vdwg.mxu0
    %vm294 = vcmp.gt.f32.partialorder %v289, 0.0
    %v295 = vmul.f32 %v289, 0.2
    %v296 = vsel %vm294, %v289, %v295
    %v297 = vld [vmem:[%s5] sm:$0xf]
    %v298 = vld [vmem:[%s5 + $0x4] sm:$0xf]
    %v299 = vld [vmem:[%s8] sm:$0xf]
    %v300 = vld [vmem:[%s8 + $0x4] sm:$0xf]
    %v301 = vld [vmem:[%s8 + $0x8] sm:$0xf]
    %v302 = vld [vmem:[%s8 + $0xc] sm:$0xf]
    %v303 = vld [vmem:[%s9] sm:$0x1]
    %v304 = vpack.c.bf16 %v56, %v56
    %v309 = vunpack.c.l.b16 %v299
    %v310 = vunpack.c.l.b16 %v300
    %v311 = vunpack.c.l.b16 %v301
    %v312 = vunpack.c.l.b16 %v302
    %v313 = vpack.c.b16 %v310, %v309
    %v314 = vpack.c.b16 %v312, %v311
    %v318 = vsel %vm77, %v304, 0
    %320 = vmatprep.subr.bf16.mxu0 0
    %321 = vmatpush1.bf16.msra.mxu0 %v313
    %322 = vmatprep.subr.bf16.mxu0 0
    %323 = vmatpush1.bf16.msra.mxu0 %v314
    %324 = vmatprep.subr.bf16.mxu0 0
    %325 = vmatpush1.bf16.msra.mxu0 0
    %326 = vmatprep.subr.bf16.mxu0 0
    %327 = vmatpush1.bf16.msra.mxu0 0
    %328 = vmatprep.subr.bf16.mxu0 0
    %329 = vmatpush1.bf16.msra.mxu0 0
    %330 = vmatprep.subr.bf16.mxu0 0
    %331 = vmatpush1.bf16.msra.mxu0 0
    %332 = vmatprep.subr.bf16.mxu0 0
    %333 = vmatpush1.bf16.msra.mxu0 0
    %334 = vmatprep.subr.bf16.mxu0 0
    %335 = vmatpush1.bf16.msra.mxu0 0
    %336 = vmatprep.subr.bf16.mxu0 0
    %337 = vmatpush1.bf16.msra.mxu0 0
    %338 = vmatprep.subr.bf16.mxu0 0
    %339 = vmatpush1.bf16.msra.mxu0 0
    %340 = vmatprep.subr.bf16.mxu0 0
    %341 = vmatpush1.bf16.msra.mxu0 0
    %342 = vmatprep.subr.bf16.mxu0 0
    %343 = vmatpush1.bf16.msra.mxu0 0
    %344 = vmatprep.subr.bf16.mxu0 0
    %345 = vmatpush1.bf16.msra.mxu0 0
    %346 = vmatprep.subr.bf16.mxu0 0
    %347 = vmatpush1.bf16.msra.mxu0 0
    %348 = vmatprep.subr.bf16.mxu0 0
    %349 = vmatpush1.bf16.msra.mxu0 0
    %350 = vmatprep.subr.bf16.mxu0 0
    %351 = vmatpush1.bf16.msra.mxu0 0
    %352 = vmatprep.mubr.bf16.mxu0 0
    %353 = vmatmul.mubr.bf16.gmra.mrb[0].mxu0 %v318
    %v354 = vpop.f32.mrb[0].mxu0
    %v355 = vadd.f32 0.0, %v354
    %v356 = vpop.f32.mrb[0].mxu0
    %v357 = vpop.f32.mrb[0].mxu0
    %v358 = vpop.f32.mrb[0].mxu0
    %359 = vdwg.mxu0
    %v360 = vpack.c.bf16 %v355, %v355
    %v362 = vlaneseq
    %v363 = vshrl.u32 %v362, 7
    %v364 = vsub.s32 0, %v363
    %v365 = vrot.slane %v303, %v364
    %v369 = vunpack.c.l.b16 %v297
    %v370 = vunpack.c.l.b16 %v298
    %v371 = vpack.c.b16 %v370, %v369
    %v373 = vsel %vm133, %v371, 0
    %v376 = vsel %vm137, %v360, 0
    %378 = vmatprep.subr.bf16.mxu0 0
    %379 = vmatpush1.bf16.msra.mxu0 %v376
    %380 = vmatprep.subr.bf16.mxu0 0
    %381 = vmatpush1.bf16.msra.mxu0 0
    %382 = vmatprep.subr.bf16.mxu0 0
    %383 = vmatpush1.bf16.msra.mxu0 0
    %384 = vmatprep.subr.bf16.mxu0 0
    %385 = vmatpush1.bf16.msra.mxu0 0
    %386 = vmatprep.subr.bf16.mxu0 0
    %387 = vmatpush1.bf16.msra.mxu0 0
    %388 = vmatprep.subr.bf16.mxu0 0
    %389 = vmatpush1.bf16.msra.mxu0 0
    %390 = vmatprep.subr.bf16.mxu0 0
    %391 = vmatpush1.bf16.msra.mxu0 0
    %392 = vmatprep.subr.bf16.mxu0 0
    %393 = vmatpush1.bf16.msra.mxu0 0
    %394 = vmatprep.subr.bf16.mxu0 0
    %395 = vmatpush1.bf16.msra.mxu0 0
    %396 = vmatprep.subr.bf16.mxu0 0
    %397 = vmatpush1.bf16.msra.mxu0 0
    %398 = vmatprep.subr.bf16.mxu0 0
    %399 = vmatpush1.bf16.msra.mxu0 0
    %400 = vmatprep.subr.bf16.mxu0 0
    %401 = vmatpush1.bf16.msra.mxu0 0
    %402 = vmatprep.subr.bf16.mxu0 0
    %403 = vmatpush1.bf16.msra.mxu0 0
    %404 = vmatprep.subr.bf16.mxu0 0
    %405 = vmatpush1.bf16.msra.mxu0 0
    %406 = vmatprep.subr.bf16.mxu0 0
    %407 = vmatpush1.bf16.msra.mxu0 0
    %408 = vmatprep.subr.bf16.mxu0 0
    %409 = vmatpush1.bf16.msra.mxu0 0
    %410 = vmatprep.mubr.bf16.mxu0 0
    %411 = vmatmul.mubr.bf16.gmra.mrb[0].mxu0 %v373
    %v412 = vpop.f32.mrb[0].mxu0
    %v413 = vadd.f32 %v365, %v412
    %v414 = vpop.f32.mrb[0].mxu0
    %v415 = vpop.f32.mrb[0].mxu0
    %v416 = vadd.f32 %v365, %v415
    %v417 = vpop.f32.mrb[0].mxu0
    %418 = vdwg.mxu0
    %vm419 = vcmp.gt.f32.partialorder %v413, 0.0
    %vm420 = vcmp.gt.f32.partialorder %v416, 0.0
    %v421 = vmul.f32 %v413, 0.2
    %v422 = vmul.f32 %v416, 0.2
    %v423 = vsel %vm419, %v413, %v421
    %v424 = vsel %vm420, %v416, %v422
    %v425 = vld [vmem:[%s4] sm:$0xf]
    %v426 = vld [vmem:[%s12] sm:$0xf]
    %v427 = vld [vmem:[%s12 + $0x4] sm:$0xf]
    %v428 = vld [vmem:[%s13] sm:$0x1]
    %v429 = vpack.c.bf16 %v424, %v423
    %v432 = vunpack.c.l.b16 %v426
    %v433 = vunpack.c.l.b16 %v427
    %v434 = vpack.c.b16 %v433, %v432
    %v437 = vsel %vm199, %v429, 0
    %439 = vmatprep.subr.bf16.mxu0 0
    %440 = vmatpush1.bf16.msra.mxu0 %v434
    %441 = vmatprep.subr.bf16.mxu0 0
    %442 = vmatpush1.bf16.msra.mxu0 0
    %443 = vmatprep.subr.bf16.mxu0 0
    %444 = vmatpush1.bf16.msra.mxu0 0
    %445 = vmatprep.subr.bf16.mxu0 0
    %446 = vmatpush1.bf16.msra.mxu0 0
    %447 = vmatprep.subr.bf16.mxu0 0
    %448 = vmatpush1.bf16.msra.mxu0 0
    %449 = vmatprep.subr.bf16.mxu0 0
    %450 = vmatpush1.bf16.msra.mxu0 0
    %451 = vmatprep.subr.bf16.mxu0 0
    %452 = vmatpush1.bf16.msra.mxu0 0
    %453 = vmatprep.subr.bf16.mxu0 0
    %454 = vmatpush1.bf16.msra.mxu0 0
    %455 = vmatprep.subr.bf16.mxu0 0
    %456 = vmatpush1.bf16.msra.mxu0 0
    %457 = vmatprep.subr.bf16.mxu0 0
    %458 = vmatpush1.bf16.msra.mxu0 0
    %459 = vmatprep.subr.bf16.mxu0 0
    %460 = vmatpush1.bf16.msra.mxu0 0
    %461 = vmatprep.subr.bf16.mxu0 0
    %462 = vmatpush1.bf16.msra.mxu0 0
    %463 = vmatprep.subr.bf16.mxu0 0
    %464 = vmatpush1.bf16.msra.mxu0 0
    %465 = vmatprep.subr.bf16.mxu0 0
    %466 = vmatpush1.bf16.msra.mxu0 0
    %467 = vmatprep.subr.bf16.mxu0 0
    %468 = vmatpush1.bf16.msra.mxu0 0
    %469 = vmatprep.subr.bf16.mxu0 0
    %470 = vmatpush1.bf16.msra.mxu0 0
    %471 = vmatprep.mubr.bf16.mxu0 0
    %472 = vmatmul.mubr.bf16.gmra.mrb[0].mxu0 %v437
    %v473 = vpop.f32.mrb[0].mxu0
    %v474 = vadd.f32 0.0, %v473
    %v475 = vpop.f32.mrb[0].mxu0
    %v476 = vpop.f32.mrb[0].mxu0
    %v477 = vadd.f32 0.0, %v476
    %v478 = vpop.f32.mrb[0].mxu0
    %479 = vdwg.mxu0
    %v480 = vpack.c.bf16 %v477, %v474
    %v482 = vlaneseq
    %v483 = vshrl.u32 %v482, 7
    %v484 = vsub.s32 0, %v483
    %v485 = vrot.slane %v428, %v484
    %v488 = vsel %vm199, %v425, 0
    %490 = vmatprep.subr.bf16.mxu0 0
    %491 = vmatpush1.bf16.msra.mxu0 %v480
    %492 = vmatprep.subr.bf16.mxu0 0
    %493 = vmatpush1.bf16.msra.mxu0 0
    %494 = vmatprep.subr.bf16.mxu0 0
    %495 = vmatpush1.bf16.msra.mxu0 0
    %496 = vmatprep.subr.bf16.mxu0 0
    %497 = vmatpush1.bf16.msra.mxu0 0
    %498 = vmatprep.subr.bf16.mxu0 0
    %499 = vmatpush1.bf16.msra.mxu0 0
    %500 = vmatprep.subr.bf16.mxu0 0
    %501 = vmatpush1.bf16.msra.mxu0 0
    %502 = vmatprep.subr.bf16.mxu0 0
    %503 = vmatpush1.bf16.msra.mxu0 0
    %504 = vmatprep.subr.bf16.mxu0 0
    %505 = vmatpush1.bf16.msra.mxu0 0
    %506 = vmatprep.subr.bf16.mxu0 0
    %507 = vmatpush1.bf16.msra.mxu0 0
    %508 = vmatprep.subr.bf16.mxu0 0
    %509 = vmatpush1.bf16.msra.mxu0 0
    %510 = vmatprep.subr.bf16.mxu0 0
    %511 = vmatpush1.bf16.msra.mxu0 0
    %512 = vmatprep.subr.bf16.mxu0 0
    %513 = vmatpush1.bf16.msra.mxu0 0
    %514 = vmatprep.subr.bf16.mxu0 0
    %515 = vmatpush1.bf16.msra.mxu0 0
    %516 = vmatprep.subr.bf16.mxu0 0
    %517 = vmatpush1.bf16.msra.mxu0 0
    %518 = vmatprep.subr.bf16.mxu0 0
    %519 = vmatpush1.bf16.msra.mxu0 0
    %520 = vmatprep.subr.bf16.mxu0 0
    %521 = vmatpush1.bf16.msra.mxu0 0
    %522 = vmatprep.mubr.bf16.mxu0 0
    %523 = vmatmul.mubr.bf16.gmra.mrb[0].mxu0 %v488
    %v524 = vpop.f32.mrb[0].mxu0
    %v525 = vadd.f32 %v485, %v524
    %v526 = vpop.f32.mrb[0].mxu0
    %v527 = vpop.f32.mrb[0].mxu0
    %v528 = vpop.f32.mrb[0].mxu0
    %529 = vdwg.mxu0
    %vm530 = vcmp.gt.f32.partialorder %v525, 0.0
    %v531 = vmul.f32 %v525, 0.2
    %v532 = vsel %vm530, %v525, %v531
    %533 = vst.msk [vmem:[#allocation2] sm:$0xff] %vm77, %v296
    %535 = vrot.lane.b32.xlu0 %v55, 32
    %v536 = vpop.permute.xlu0 %535
    %vm538 = vcmask 523520
    %539 = vst.msk [vmem:[#allocation2] sm:$0xff] %vm538, %v536
    %541 = vrot.lane.b32.xlu0 %v532, 64
    %v542 = vpop.permute.xlu0 %541
    %vm544 = vcmask 785920
    %545 = vst.msk [vmem:[#allocation2] sm:$0xff] %vm544, %v542
    %547 = vrot.lane.b32.xlu0 %v56, 96
    %v548 = vpop.permute.xlu0 %547
    %vm550 = vcmask 1048320
    %551 = vst.msk [vmem:[#allocation2] sm:$0xff] %vm550, %v548
    %v552 = vld [vmem:[#allocation2] sm:$0xff]
    %v553 = vpack.c.bf16 %v552, %v552
    %v554 = vld [vmem:[%s14] sm:$0xf]
    %v555 = vld [vmem:[%s14 + $0x4] sm:$0xf]
    %v556 = vld [vmem:[%s14 + $0x8] sm:$0xf]
    %v557 = vld [vmem:[%s14 + $0xc] sm:$0xf]
    %v558 = vld [vmem:[%s14 + $0x10] sm:$0xf]
    %v559 = vld [vmem:[%s14 + $0x14] sm:$0xf]
    %v560 = vld [vmem:[%s14 + $0x18] sm:$0xf]
    %v561 = vld [vmem:[%s14 + $0x1c] sm:$0xf]
    %v562 = vld [vmem:[%s14 + $0x20] sm:$0xf]
    %v563 = vld [vmem:[%s14 + $0x24] sm:$0xf]
    %v564 = vld [vmem:[%s14 + $0x28] sm:$0xf]
    %v565 = vld [vmem:[%s14 + $0x2c] sm:$0xf]
    %v566 = vld [vmem:[%s14 + $0x30] sm:$0xf]
    %v567 = vld [vmem:[%s14 + $0x34] sm:$0xf]
    %v568 = vld [vmem:[%s14 + $0x38] sm:$0xf]
    %v569 = vld [vmem:[%s14 + $0x3c] sm:$0xf]
    %v570 = vld [vmem:[%s15] sm:$0x1]
    %v572 = vlaneseq
    %v573 = vshrl.u32 %v572, 7
    %v574 = vsub.s32 0, %v573
    %v575 = vrot.slane %v570, %v574
    %v593 = vunpack.c.l.b16 %v554
    %v594 = vunpack.c.l.b16 %v555
    %v595 = vunpack.c.l.b16 %v556
    %v596 = vunpack.c.l.b16 %v557
    %v597 = vunpack.c.l.b16 %v558
    %v598 = vunpack.c.l.b16 %v559
    %v599 = vunpack.c.l.b16 %v560
    %v600 = vunpack.c.l.b16 %v561
    %v601 = vunpack.c.l.b16 %v562
    %v602 = vunpack.c.l.b16 %v563
    %v603 = vunpack.c.l.b16 %v564
    %v604 = vunpack.c.l.b16 %v565
    %v605 = vunpack.c.l.b16 %v566
    %v606 = vunpack.c.l.b16 %v567
    %v607 = vunpack.c.l.b16 %v568
    %v608 = vunpack.c.l.b16 %v569
    %v609 = vpack.c.b16 %v594, %v593
    %v610 = vpack.c.b16 %v596, %v595
    %v611 = vpack.c.b16 %v598, %v597
    %v612 = vpack.c.b16 %v600, %v599
    %v613 = vpack.c.b16 %v602, %v601
    %v614 = vpack.c.b16 %v604, %v603
    %v615 = vpack.c.b16 %v606, %v605
    %v616 = vpack.c.b16 %v608, %v607
    %625 = vmatprep.subr.bf16.mxu0 0
    %626 = vmatpush1.bf16.msra.mxu0 %v609
    %627 = vmatprep.subr.bf16.mxu0 0
    %628 = vmatpush1.bf16.msra.mxu0 %v610
    %629 = vmatprep.subr.bf16.mxu0 0
    %630 = vmatpush1.bf16.msra.mxu0 %v611
    %631 = vmatprep.subr.bf16.mxu0 0
    %632 = vmatpush1.bf16.msra.mxu0 %v612
    %633 = vmatprep.subr.bf16.mxu0 0
    %634 = vmatpush1.bf16.msra.mxu0 %v613
    %635 = vmatprep.subr.bf16.mxu0 0
    %636 = vmatpush1.bf16.msra.mxu0 %v614
    %637 = vmatprep.subr.bf16.mxu0 0
    %638 = vmatpush1.bf16.msra.mxu0 %v615
    %639 = vmatprep.subr.bf16.mxu0 0
    %640 = vmatpush1.bf16.msra.mxu0 %v616
    %641 = vmatprep.subr.bf16.mxu0 0
    %642 = vmatpush1.bf16.msra.mxu0 0
    %643 = vmatprep.subr.bf16.mxu0 0
    %644 = vmatpush1.bf16.msra.mxu0 0
    %645 = vmatprep.subr.bf16.mxu0 0
    %646 = vmatpush1.bf16.msra.mxu0 0
    %647 = vmatprep.subr.bf16.mxu0 0
    %648 = vmatpush1.bf16.msra.mxu0 0
    %649 = vmatprep.subr.bf16.mxu0 0
    %650 = vmatpush1.bf16.msra.mxu0 0
    %651 = vmatprep.subr.bf16.mxu0 0
    %652 = vmatpush1.bf16.msra.mxu0 0
    %653 = vmatprep.subr.bf16.mxu0 0
    %654 = vmatpush1.bf16.msra.mxu0 0
    %655 = vmatprep.subr.bf16.mxu0 0
    %656 = vmatpush1.bf16.msra.mxu0 0
    %657 = vmatprep.mubr.bf16.mxu0 0
    %658 = vmatmul.mubr.bf16.gmra.mrb[0].mxu0 %v553
    %v659 = vpop.f32.mrb[0].mxu0
    %v660 = vadd.f32 %v575, %v659
    %v661 = vpop.f32.mrb[0].mxu0
    %v662 = vpop.f32.mrb[0].mxu0
    %v663 = vpop.f32.mrb[0].mxu0
    %664 = vdwg.mxu0
    %v665 = vmax.f32 %v660, 0.0
    %v666 = vmul.f32 %v665, 0.7
    %v667 = vmul.f32 %v665, 0.3
    %669 = vrot.lane.b32.xlu0 %v667, 96
    %v670 = vpop.permute.xlu0 %669
    %v672 = vadd.f32 %v666, %v670
    %673 = vst.msk [vmem:[#allocation3] sm:$0xff] %vm77, %v672
    // Predicated region
    $region66: #{tpu_custom_call.1} parent=1 // pred_check
      _
    $region67: #{tpu_custom_call.1} parent=1 // pred_check_branch
      %675 = sbr.rel (0) target = $region69
    $region68: #{tpu_custom_call.1} parent=1 // pred_region
      %s677 = ssub.s32 128, 128
      %678 = vsyncadd [#allocation4], %s677
      %s680 = sshll.u32 [#allocation3], 4
      %s681 = int_to_ptr.vmem [resolvable:$true] %s680
      %683 = dma.vmem_to_hbm [thread:$0]  %s681, 128, %s16, [#allocation4]
    $region69: #{tpu_custom_call.1} parent=1 // pred_fallthru
      _
    // Predicated region
    $region70: #{tpu_custom_call.1} parent=1 // pred_check
      _
    $region71: #{tpu_custom_call.1} parent=1 // pred_check_branch
      %685 = sbr.rel (0) target = $region73
    $region72: #{tpu_custom_call.1} parent=1 // pred_region
      %686 = dma.done [#allocation4], 128
    $region73: #{tpu_custom_call.1} parent=1 // pred_fallthru
      _
    %687 = vsyncpa [#allocation4], 1

</llo_original>
